<compile_context>
chip_gen: v6e
topology: v6e:2x2x1
jax: 0.10.0
libtpu: 0.0.40
codegen_flags: <defaults>
</compile_context>

<pallas_src>
import math

import jax
import jax.numpy as jnp
from jax.experimental import pallas as pl
from jax.experimental.pallas import tpu as pltpu

_INV_SQRT2 = 1.0 / math.sqrt(2.0)

# Abramowitz & Stegun 7.1.26 erf coefficients (max |erf error| <= 1.5e-7).
# TODO(synk): lax.erf has no reliable Mosaic/Pallas-TPU lowering, so erf is
# computed in-kernel via this rational approximation (exp/mul/select only).
_ERF_P = 0.3275911
# 1/sqrt(2) folded into p so t = 1/(1 + p*|x/sqrt(2)|) uses |x| directly.
_P_FOLD = _ERF_P * _INV_SQRT2
# Trailing 0.5 of gelu folded into the coefficients:
#   half_pe = 0.5 * poly(t) * exp(-x^2/2)
_HA1 = 0.5 * 0.254829592
_HA2 = 0.5 * -0.284496736
_HA3 = 0.5 * 1.421413741
_HA4 = 0.5 * -1.453152027
_HA5 = 0.5 * 1.061405429

# Per-buffer block target (~2 MiB for f32). Double-buffered in+out => ~8 MiB
# of I/O VMEM plus elementwise temporaries; 32 MiB scoped VMEM covers every
# generation (v5e/v6e 128 MiB physical, v7x 64 MiB physical).
_TARGET_BLOCK_BYTES = 2 * 1024 * 1024
_VMEM_LIMIT_BYTES = 32 * 1024 * 1024
# 128-unaligned arrays up to this many elements run as one full-array block.
_SMALL_SINGLE_BLOCK_ELEMS = 256 * 1024


def _gelu_kernel(x_ref, o_ref):
    x = x_ref[...].astype(jnp.float32)
    ax = jnp.abs(x)
    # EUP-capable reciprocal; approx=True would shave a few more VALU ops but
    # its error is amplified through t^5, so keep the accurate form.
    t = pl.reciprocal(1.0 + _P_FOLD * ax, approx=False)
    half_poly = t * (_HA1 + t * (_HA2 + t * (_HA3 + t * (_HA4 + t * _HA5))))
    # exp underflows to 0 for |x| >~ 13, correctly saturating cdf to {0, 1}.
    half_pe = half_poly * jnp.exp(-0.5 * x * x)
    cdf = jnp.where(x >= 0.0, 1.0 - half_pe, half_pe)  # = 0.5*(1+erf(x/sqrt2))
    o_ref[...] = (x * cdf).astype(o_ref.dtype)


def _gelu_2d(x2d):
    rows, lane = x2d.shape
    itemsize = x2d.dtype.itemsize
    n = rows * lane

    block_rows = _TARGET_BLOCK_BYTES // (lane * itemsize)
    if block_rows >= rows:
        block_rows = rows                       # single block == full dims
    else:
        block_rows = max(8, (block_rows // 8) * 8)

    grid = (pl.cdiv(rows, block_rows),)

    return pl.pallas_call(
        _gelu_kernel,
        out_shape=jax.ShapeDtypeStruct((rows, lane), x2d.dtype),
        grid_spec=pltpu.PrefetchScalarGridSpec(
            num_scalar_prefetch=0,
            grid=grid,
            in_specs=[pl.BlockSpec((block_rows, lane), lambda i: (i, 0))],
            out_specs=pl.BlockSpec((block_rows, lane), lambda i: (i, 0)),
        ),
        compiler_params=pltpu.CompilerParams(
            dimension_semantics=("parallel",),
            vmem_limit_bytes=_VMEM_LIMIT_BYTES,
        ),
        cost_estimate=pl.CostEstimate(
            flops=18 * n,
            transcendentals=2 * n,
            bytes_accessed=2 * n * itemsize,
        ),
    )(x2d)


def _pick_lane(n):
    for cand in (512, 256, 128):
        if n % cand == 0:
            return cand
    return None


def gelu(x):
    """Exact (erf-based) GeLU, elementwise, any shape/dtype. Matches mmt.GeLU."""
    orig_shape = x.shape
    n = x.size
    if n == 0:
        return x

    flat = x.reshape(-1)

    lane = _pick_lane(n)
    if lane is not None:
        # Lane-dense, copy-free path: n is a multiple of 128.
        return _gelu_2d(flat.reshape(n // lane, lane)).reshape(orig_shape)

    if n <= _SMALL_SINGLE_BLOCK_ELEMS:
        # Small odd-sized array: one full-array block, masked lane edge, no pad.
        return _gelu_2d(flat.reshape(1, n)).reshape(orig_shape)

    # Large and 128-unaligned: kernel on the aligned prefix, tiny (<128 elem)
    # tail in plain JAX; one concat instead of a full-array pad + slice.
    main = (n // 128) * 128
    head_lane = _pick_lane(main)
    head = _gelu_2d(flat[:main].reshape(main // head_lane, head_lane)).reshape(-1)
    tail = flat[main:].astype(jnp.float32)
    tail_out = (tail * 0.5 * (1.0 + jax.scipy.special.erf(tail * _INV_SQRT2))
                ).astype(x.dtype)
    return jnp.concatenate([head, tail_out]).reshape(orig_shape)


if __name__ == "__main__":
    key = jax.random.PRNGKey(0)
    k1, k2, k3, k4, k5 = jax.random.split(key, 5)

    # Small primary input consistent with an elementwise activation module.
    x1 = jax.random.normal(k1, (2, 4, 16, 16), dtype=jnp.float32)
    # Odd total size (185 elems) -> single masked full-array block, no pad.
    x2 = jax.random.normal(k2, (5, 37), dtype=jnp.float32)
    # Multiple-of-512 size, single-block path.
    x3 = jax.random.normal(k3, (800, 384), dtype=jnp.float32)
    # Larger input -> multi-block pipelined grid with a partial last block.
    x4 = jax.random.normal(k4, (2000, 768), dtype=jnp.float32)
    # Large and 128-unaligned -> aligned-prefix kernel + plain-JAX tail.
    x5 = jax.random.normal(k5, (3, 100003), dtype=jnp.float32)

    def ref_gelu(x):
        return x * 0.5 * (1.0 + jax.scipy.special.erf(x * _INV_SQRT2))

    for x in (x1, x2, x3, x4, x5):
        out = jax.block_until_ready(gelu(x))
        expected = ref_gelu(x)
        assert out.shape == x.shape and out.dtype == x.dtype
        assert jnp.allclose(out, expected, atol=1e-5, rtol=1e-5), (
            float(jnp.max(jnp.abs(out - expected))))

    print("KERNEL_OK")
</pallas_src>

<mosaic_0001>
module attributes {stable_mosaic.version = 11 : i64} {
  func.func @_gelu_kernel(%arg0: i32, %arg1: memref<4x512xf32, #tpu.memory_space<vmem>>, %arg2: memref<4x512xf32, #tpu.memory_space<vmem>>) attributes {dimension_semantics = [#tpu.dimension_semantics<parallel>], iteration_bounds = array<i64: 1>, scalar_prefetch = 0 : i64, scratch_operands = 0 : i64, tpu.core_type = #tpu.core_type<tc>, window_params = [{transform_indices = @transform_0, window_bounds = array<i64: 4, 512>}, {transform_indices = @transform_1, window_bounds = array<i64: 4, 512>}]} {
    %c0 = arith.constant 0 : index
    %c0_0 = arith.constant 0 : index
    %0 = vector.load %arg1[%c0, %c0_0] : memref<4x512xf32, #tpu.memory_space<vmem>>, vector<4x512xf32>
    %1 = math.absf %0 : vector<4x512xf32>
    %cst = arith.constant 0.231641889 : f32
    %2 = vector.broadcast %cst : f32 to vector<4x512xf32>
    %3 = arith.mulf %2, %1 : vector<4x512xf32>
    %cst_1 = arith.constant 1.000000e+00 : f32
    %4 = vector.broadcast %cst_1 : f32 to vector<4x512xf32>
    %5 = arith.addf %4, %3 : vector<4x512xf32>
    %6 = tpu.reciprocal %5 : vector<4x512xf32> -> vector<4x512xf32>
    %cst_2 = arith.constant 0.53070271 : f32
    %7 = vector.broadcast %cst_2 : f32 to vector<4x512xf32>
    %8 = arith.mulf %6, %7 : vector<4x512xf32>
    %cst_3 = arith.constant -0.72657603 : f32
    %9 = vector.broadcast %cst_3 : f32 to vector<4x512xf32>
    %10 = arith.addf %9, %8 : vector<4x512xf32>
    %11 = arith.mulf %6, %10 : vector<4x512xf32>
    %cst_4 = arith.constant 0.710706889 : f32
    %12 = vector.broadcast %cst_4 : f32 to vector<4x512xf32>
    %13 = arith.addf %12, %11 : vector<4x512xf32>
    %14 = arith.mulf %6, %13 : vector<4x512xf32>
    %cst_5 = arith.constant -0.142248362 : f32
    %15 = vector.broadcast %cst_5 : f32 to vector<4x512xf32>
    %16 = arith.addf %15, %14 : vector<4x512xf32>
    %17 = arith.mulf %6, %16 : vector<4x512xf32>
    %cst_6 = arith.constant 0.127414793 : f32
    %18 = vector.broadcast %cst_6 : f32 to vector<4x512xf32>
    %19 = arith.addf %18, %17 : vector<4x512xf32>
    %20 = arith.mulf %6, %19 : vector<4x512xf32>
    %cst_7 = arith.constant -5.000000e-01 : f32
    %21 = vector.broadcast %cst_7 : f32 to vector<4x512xf32>
    %22 = arith.mulf %21, %0 : vector<4x512xf32>
    %23 = arith.mulf %22, %0 : vector<4x512xf32>
    %24 = math.exp %23 : vector<4x512xf32>
    %25 = arith.mulf %20, %24 : vector<4x512xf32>
    %cst_8 = arith.constant 0.000000e+00 : f32
    %26 = vector.broadcast %cst_8 : f32 to vector<4x512xf32>
    %27 = arith.cmpf oge, %0, %26 : vector<4x512xf32>
    %cst_9 = arith.constant 1.000000e+00 : f32
    %28 = vector.broadcast %cst_9 : f32 to vector<4x512xf32>
    %29 = arith.subf %28, %25 : vector<4x512xf32>
    %30 = arith.select %27, %29, %25 : vector<4x512xi1>, vector<4x512xf32>
    %31 = arith.mulf %0, %30 : vector<4x512xf32>
    %c0_10 = arith.constant 0 : index
    %c0_11 = arith.constant 0 : index
    %32 = vector.load %arg2[%c0_10, %c0_11] : memref<4x512xf32, #tpu.memory_space<vmem>>, vector<4x512xf32>
    tpu.vector_store %arg2[%c0_10, %c0_11], %31 {strides = array<i32>} : memref<4x512xf32, #tpu.memory_space<vmem>>, vector<4x512xf32>,
    return
  }
  func.func @transform_0(%arg0: i32) -> (i32, i32) {
    %c0_i32 = arith.constant 0 : i32
    %c0_i32_0 = arith.constant 0 : i32
    return %arg0, %c0_i32 : i32, i32
  }
  func.func @transform_1(%arg0: i32) -> (i32, i32) {
    %c0_i32 = arith.constant 0 : i32
    %c0_i32_0 = arith.constant 0 : i32
    return %arg0, %c0_i32 : i32, i32
  }
}

</mosaic_0001>

<llo_original>
// kernel: tpu_custom_call.1
$region0: #{tpu_custom_call.1}
  #allocation0 [shape = 'u32[]', space=smem, size = 0x4, offset = 0x4, fixed_abs, tag = 'smem constant byte address 0x4 - core index']
  #allocation1 [shape = 'u32[144,128]{1,0:T(1,128)}', space=vmem, size = 0x12000, scoped, tag = 'internal scratch']
  %s0 = inlined_call_operand.hbm [shape: f32[4,512], index: 0, kind: input, shape index: {}]
  %s1 = inlined_call_operand.hbm [shape: f32[4,512], index: 1, kind: output, shape index: {}]
  %s2 = sld [smem:[#allocation0]]
  $region18: #{tpu_custom_call.1} parent=0
    _
  %s4 = ssub.s32 1, %s2
  %s5 = scalar_select 0, %s4, %s2
  $region1: #{tpu_custom_call.1} parent=0
    #allocation2 [shape = 'u8[8192]{0}', space=vmem, size = 0x2000, scoped, tag = 'input window, operand 0, single buffered']
    #allocation3 [shape = 's32[1]{0}', space=sflag, size = 0x4, scoped, tag = 'scoped memory for tpu_custom_call.1']
    #allocation4 [shape = 's32[1]{0}', space=sflag, size = 0x4, scoped, tag = 'scoped memory for tpu_custom_call.1']
    #allocation5 [shape = 'u8[8192]{0}', space=vmem, size = 0x2000, scoped, tag = 'output window, operand 0, single buffered']
    %6 = vsyncpa [#allocation3], 0
    %7 = vsyncpa [#allocation4], 0
    // Predicated region
    $region2: #{tpu_custom_call.1} parent=1 // pred_check
      _
    $region3: #{tpu_custom_call.1} parent=1 // pred_check_branch
      %9 = sbr.rel (0) target = $region5
    $region4: #{tpu_custom_call.1} parent=1 // pred_region
      %s11 = ssub.s32 256, 256
      %12 = vsyncadd [#allocation3], %s11
      %s14 = sshll.u32 [#allocation2], 4
      %s15 = int_to_ptr.vmem [resolvable:$true] %s14
      %17 = dma.hbm_to_vmem [thread:$0]  %s0, 256, %s15, [#allocation3]
    $region5: #{tpu_custom_call.1} parent=1 // pred_fallthru
      _
    // Predicated region
    $region6: #{tpu_custom_call.1} parent=1 // pred_check
      _
    $region7: #{tpu_custom_call.1} parent=1 // pred_check_branch
      %19 = sbr.rel (0) target = $region9
    $region8: #{tpu_custom_call.1} parent=1 // pred_region
      %20 = dma.done [#allocation3], 256
    $region9: #{tpu_custom_call.1} parent=1 // pred_fallthru
      _
    %v21 = vld [vmem:[#allocation2] sm:$0xff]
    %v22 = vld [vmem:[#allocation2 + $0x8] sm:$0xff]
    %v23 = vand.u32 2147483647, %v21
    %v24 = vand.u32 2147483647, %v22
    %v25 = vmul.f32 %v23, 0.23164189
    %v26 = vmul.f32 %v24, 0.23164189
    %v27 = vadd.f32 %v25, 1.0
    %v28 = vadd.f32 %v26, 1.0
    %v29 = vrcp.pop %v27
    %v30 = vrcp.pop %v28
    %v31 = vmul.f32 %v29, 0.5307027
    %v32 = vmul.f32 %v30, 0.5307027
    %v33 = vadd.f32 %v31, -0.72657603
    %v34 = vadd.f32 %v32, -0.72657603
    %v35 = vmul.f32 %v29, %v33
    %v36 = vmul.f32 %v30, %v34
    %v37 = vadd.f32 %v35, 0.7107069
    %v38 = vadd.f32 %v36, 0.7107069
    %v39 = vmul.f32 %v29, %v37
    %v40 = vmul.f32 %v30, %v38
    %v41 = vadd.f32 %v39, -0.14224836
    %v42 = vadd.f32 %v40, -0.14224836
    %v43 = vmul.f32 %v29, %v41
    %v44 = vmul.f32 %v30, %v42
    %v45 = vadd.f32 %v43, 0.1274148
    %v46 = vadd.f32 %v44, 0.1274148
    %v47 = vmul.f32 %v29, %v45
    %v48 = vmul.f32 %v30, %v46
    %v49 = vmul.f32 %v21, -0.5
    %v50 = vmul.f32 %v22, -0.5
    %v51 = vmul.f32 %v49, %v21
    %v52 = vmul.f32 %v50, %v22
    %v53 = vmul.f32 %v51, 1.442695
    %v54 = vpow.pop %v53
    %v55 = vmul.f32 %v52, 1.442695
    %v56 = vpow.pop %v55
    %v57 = vmul.f32 %v47, %v54
    %v58 = vmul.f32 %v48, %v56
    %vm59 = vcmp.ge.f32.partialorder %v21, 0.0
    %vm60 = vcmp.ge.f32.partialorder %v22, 0.0
    %v61 = vsub.f32 1.0, %v57
    %v62 = vsub.f32 1.0, %v58
    %v63 = vsel %vm59, %v61, %v57
    %v64 = vsel %vm60, %v62, %v58
    %v65 = vmul.f32 %v21, %v63
    %v66 = vmul.f32 %v22, %v64
    %67 = vst [vmem:[#allocation5] sm:$0xff] %v65
    %68 = vst [vmem:[#allocation5 + $0x8] sm:$0xff] %v66
    // Predicated region
    $region10: #{tpu_custom_call.1} parent=1 // pred_check
      _
    $region11: #{tpu_custom_call.1} parent=1 // pred_check_branch
      %70 = sbr.rel (0) target = $region13
    $region12: #{tpu_custom_call.1} parent=1 // pred_region
      %s72 = ssub.s32 256, 256
      %73 = vsyncadd [#allocation4], %s72
      %s75 = sshll.u32 [#allocation5], 4
      %s76 = int_to_ptr.vmem [resolvable:$true] %s75
      %78 = dma.vmem_to_hbm [thread:$0]  %s76, 256, %s1, [#allocation4]
    $region13: #{tpu_custom_call.1} parent=1 // pred_fallthru
      _
    // Predicated region
    $region14: #{tpu_custom_call.1} parent=1 // pred_check
      _
    $region15: #{tpu_custom_call.1} parent=1 // pred_check_branch
      %80 = sbr.rel (0) target = $region17
    $region16: #{tpu_custom_call.1} parent=1 // pred_region
      %81 = dma.done [#allocation4], 256
    $region17: #{tpu_custom_call.1} parent=1 // pred_fallthru
      _
    %82 = vsyncpa [#allocation3], 1
    %83 = vsyncpa [#allocation4], 1

</llo_original>
